<compile_context>
chip_gen: v6e
topology: v6e:2x2x1
jax: 0.10.0
libtpu: 0.0.40
codegen_flags: <defaults>
</compile_context>

<pallas_src>
import jax
import jax.numpy as jnp
from jax import lax
from jax.experimental import pallas as pl
from jax.experimental.pallas import tpu as pltpu


def _mlp_softmax_kernel(inv_t_ref, x_ref, w1_ref, b1_ref, w2_ref, b2_ref, o_ref):
    # x arrives in f32; cast to bf16 in-kernel (MXU-native) instead of paying a
    # separate wrapper-side HBM read+write of x.
    x = x_ref[...].astype(jnp.bfloat16)                              # (TB, S)

    # Layer 1: Linear(state_dim -> 128) + ReLU. Weights keep the PyTorch
    # (out, in) layout; contract on axis 1 of the weight (trans_b is free on the
    # MXU). bf16 operands, f32 accumulation.
    h = lax.dot_general(
        x, w1_ref[...],
        dimension_numbers=(((1,), (1,)), ((), ())),
        preferred_element_type=jnp.float32) + b1_ref[...]            # (TB, H) f32
    h = jnp.maximum(h, 0.0)
    # Dropout(p=0.1) -> identity in eval mode.
    # TODO(synk): training-mode dropout (pltpu.prng_seed + prng_random_bits mask) not implemented.

    # Layer 2: Linear(128 -> action_dim). 1/temperature is applied to the f32
    # logits (scalar lives in SMEM via scalar prefetch), keeping bf16 weights
    # unscaled so small temperatures don't amplify bf16 rounding.
    logits = lax.dot_general(
        h.astype(jnp.bfloat16), w2_ref[...],
        dimension_numbers=(((1,), (1,)), ((), ())),
        preferred_element_type=jnp.float32) + b2_ref[...]            # (TB, A) f32
    logits = logits * inv_t_ref[0]

    # Numerically stable softmax along the last axis. Exact divide for the
    # normalizer: it IS the quantity that makes rows sum to 1, so no approx here.
    m = jnp.max(logits, axis=-1, keepdims=True)
    e = jnp.exp(logits - m)
    denom = jnp.sum(e, axis=-1, keepdims=True)
    o_ref[...] = (e / denom).astype(o_ref.dtype)


def _round_up(x, m):
    return ((x + m - 1) // m) * m


def prepare_params(w1, b1, w2, b2):
    """One-time parameter prep (hoisted out of the per-call hot path).

    PyTorch Linear layout: w1 (128, S), b1 (128,), w2 (A, 128), b2 (A,).
    """
    hidden = w1.shape[0]
    action_dim = w2.shape[0]
    w1_bf16 = jnp.asarray(w1, jnp.bfloat16)
    b1_row = jnp.asarray(b1, jnp.float32).reshape(1, hidden)
    w2_bf16 = jnp.asarray(w2, jnp.bfloat16)
    b2_row = jnp.asarray(b2, jnp.float32).reshape(1, action_dim)
    return (w1_bf16, b1_row, w2_bf16, b2_row)


def neural_net_forward(state, params, temperature=1.0, *, block_batch=4096):
    """Eval-mode forward of NeuralNet.

    state: (B, state_dim) f32; params from prepare_params().
    Returns softmax((ReLU(state @ w1.T + b1) @ w2.T + b2) / temperature),
    shape (B, action_dim), f32.
    """
    w1_bf16, b1_row, w2_bf16, b2_row = params
    batch, state_dim = state.shape
    hidden = w1_bf16.shape[0]
    action_dim = w2_bf16.shape[0]

    state = jnp.asarray(state, jnp.float32)
    inv_t = (jnp.float32(1.0) / jnp.asarray(temperature, jnp.float32)).reshape(1)

    # Batch tiling: stream the batch through a pipelined grid; weights stay
    # VMEM-resident (index_map -> (0, 0)). For non-tiny batches cap the tile so
    # the grid has >= 2 steps (keeps both v7x TensorCores busy); tiles stay in
    # the ~4K-row range, well inside v7x's 64 MiB per-TC VMEM.
    if batch <= 16:
        tb = batch                               # block == full dim
    else:
        tb = min(_round_up(block_batch, 8), _round_up(-(-batch // 2), 8))
    grid = (pl.cdiv(batch, tb),)
    # NOTE: if batch % tb != 0, the padded rows of the last block hold garbage
    # that flows through exp (possibly inf) and is discarded at writeback.

    # Advisory cost estimate for XLA's scheduler around the custom call.
    cost = pl.CostEstimate(
        flops=2 * batch * (state_dim * hidden + hidden * action_dim),
        transcendentals=batch * action_dim,
        bytes_accessed=(batch * (4 * state_dim + 4 * action_dim)
                        + 2 * (hidden * state_dim + action_dim * hidden)
                        + 4 * (hidden + action_dim)),
    )

    out = pl.pallas_call(
        _mlp_softmax_kernel,
        out_shape=jax.ShapeDtypeStruct((batch, action_dim), jnp.float32),
        grid_spec=pltpu.PrefetchScalarGridSpec(
            num_scalar_prefetch=1,                                       # inv_t -> SMEM
            grid=grid,
            in_specs=[
                pl.BlockSpec((tb, state_dim), lambda i, inv_t: (i, 0)),      # x: streamed
                pl.BlockSpec((hidden, state_dim), lambda i, inv_t: (0, 0)),  # w1: resident
                pl.BlockSpec((1, hidden), lambda i, inv_t: (0, 0)),          # b1: resident
                pl.BlockSpec((action_dim, hidden), lambda i, inv_t: (0, 0)), # w2: resident
                pl.BlockSpec((1, action_dim), lambda i, inv_t: (0, 0)),      # b2: resident
            ],
            out_specs=pl.BlockSpec((tb, action_dim), lambda i, inv_t: (i, 0)),
        ),
        compiler_params=pltpu.CompilerParams(
            # Batch axis is embarrassingly parallel -> megacore sharding on v7x,
            # no-op on single-TC v5e/v6e.
            dimension_semantics=("parallel",),
            # Above the 16 MiB (v5e) / 32 MiB (v6e/v7x) scoped defaults, safely
            # below v7x's 64 MiB physical VMEM.
            vmem_limit_bytes=48 * 1024 * 1024,
        ),
        cost_estimate=cost,
    )(inv_t, state, w1_bf16, b1_row, w2_bf16, b2_row)
    return out


if __name__ == "__main__":
    # Small, deterministic synthetic setup (hidden=128 is fixed by the module).
    batch = 8
    state_dim = 32
    hidden = 128
    action_dim = 8

    key = jax.random.PRNGKey(0)
    k_x, k_w1, k_b1, k_w2, k_b2 = jax.random.split(key, 5)

    state = jax.random.normal(k_x, (batch, state_dim), dtype=jnp.float32)
    # PyTorch-layout parameters (out_features, in_features), deterministic init.
    w1 = jax.random.normal(k_w1, (hidden, state_dim), dtype=jnp.float32) * 0.1
    b1 = jax.random.normal(k_b1, (hidden,), dtype=jnp.float32) * 0.1
    w2 = jax.random.normal(k_w2, (action_dim, hidden), dtype=jnp.float32) * 0.1
    b2 = jax.random.normal(k_b2, (action_dim,), dtype=jnp.float32) * 0.1

    params = prepare_params(w1, b1, w2, b2)   # one-time prep, out of the hot path
    probs = neural_net_forward(state, params, temperature=1.0)
    probs = jax.block_until_ready(probs)

    # Pure-JAX f32 reference (eval-mode dropout = identity). The kernel uses bf16
    # matmul operands with f32 accumulation, hence the loosened elementwise
    # tolerance; row sums are exact (exact divide in the softmax).
    h_ref = jnp.maximum(state @ w1.T + b1, 0.0)
    logits_ref = h_ref @ w2.T + b2
    ref = jax.nn.softmax(logits_ref / 1.0, axis=-1)
    assert probs.shape == (batch, action_dim)
    assert jnp.allclose(probs, ref, atol=2e-2, rtol=2e-2)
    assert jnp.allclose(jnp.sum(probs, axis=-1), 1.0, atol=1e-3)

    print("KERNEL_OK")
</pallas_src>

<mosaic_0001>
module attributes {stable_mosaic.version = 11 : i64} {
  func.func @_mlp_softmax_kernel(%arg0: i32, %arg1: memref<1xf32, #tpu.memory_space<smem>>, %arg2: memref<8x32xf32, #tpu.memory_space<vmem>>, %arg3: memref<128x32xbf16, #tpu.memory_space<vmem>>, %arg4: memref<1x128xf32, #tpu.memory_space<vmem>>, %arg5: memref<8x128xbf16, #tpu.memory_space<vmem>>, %arg6: memref<1x8xf32, #tpu.memory_space<vmem>>, %arg7: memref<8x8xf32, #tpu.memory_space<vmem>>) attributes {dimension_semantics = [#tpu.dimension_semantics<parallel>], iteration_bounds = array<i64: 1>, scalar_prefetch = 1 : i64, scratch_operands = 0 : i64, tpu.core_type = #tpu.core_type<tc>, window_params = [{transform_indices = @transform_0, window_bounds = array<i64: 8, 32>}, {pipeline_mode = #tpu.pipeline_mode<synchronous>, transform_indices = @transform_1, window_bounds = array<i64: 128, 32>}, {pipeline_mode = #tpu.pipeline_mode<synchronous>, transform_indices = @transform_2, window_bounds = array<i64: 1, 128>}, {pipeline_mode = #tpu.pipeline_mode<synchronous>, transform_indices = @transform_3, window_bounds = array<i64: 8, 128>}, {pipeline_mode = #tpu.pipeline_mode<synchronous>, transform_indices = @transform_4, window_bounds = array<i64: 1, 8>}, {transform_indices = @transform_5, window_bounds = array<i64: 8, 8>}]} {
    %c0 = arith.constant 0 : index
    %c0_0 = arith.constant 0 : index
    %0 = vector.load %arg2[%c0, %c0_0] : memref<8x32xf32, #tpu.memory_space<vmem>>, vector<8x32xf32>
    %1 = arith.truncf %0 : vector<8x32xf32> to vector<8x32xbf16>
    %c0_1 = arith.constant 0 : index
    %c0_2 = arith.constant 0 : index
    %2 = vector.load %arg3[%c0_1, %c0_2] : memref<128x32xbf16, #tpu.memory_space<vmem>>, vector<128x32xbf16>
    %cst = arith.constant dense<0.000000e+00> : vector<8x128xf32>
    %3 = tpu.matmul %1, %2, %cst {dimension_numbers = #tpu.dot_dimension_numbers<[1], [1], [0], [0], [0, 0, 1, 0], [], []>} : vector<8x32xbf16>, vector<128x32xbf16>, vector<8x128xf32> -> vector<8x128xf32>
    %c0_3 = arith.constant 0 : index
    %c0_4 = arith.constant 0 : index
    %4 = vector.load %arg4[%c0_3, %c0_4] : memref<1x128xf32, #tpu.memory_space<vmem>>, vector<1x128xf32>
    %5 = vector.broadcast %4 : vector<1x128xf32> to vector<8x128xf32>
    %6 = arith.addf %3, %5 : vector<8x128xf32>
    %cst_5 = arith.constant 0.000000e+00 : f32
    %7 = vector.broadcast %cst_5 : f32 to vector<8x128xf32>
    %8 = arith.maximumf %6, %7 : vector<8x128xf32>
    %9 = arith.truncf %8 : vector<8x128xf32> to vector<8x128xbf16>
    %c0_6 = arith.constant 0 : index
    %c0_7 = arith.constant 0 : index
    %10 = vector.load %arg5[%c0_6, %c0_7] : memref<8x128xbf16, #tpu.memory_space<vmem>>, vector<8x128xbf16>
    %cst_8 = arith.constant dense<0.000000e+00> : vector<8x8xf32>
    %11 = tpu.matmul %9, %10, %cst_8 {dimension_numbers = #tpu.dot_dimension_numbers<[1], [1], [0], [0], [0, 0, 1, 0], [], []>} : vector<8x128xbf16>, vector<8x128xbf16>, vector<8x8xf32> -> vector<8x8xf32>
    %c0_9 = arith.constant 0 : index
    %c0_10 = arith.constant 0 : index
    %12 = vector.load %arg6[%c0_9, %c0_10] : memref<1x8xf32, #tpu.memory_space<vmem>>, vector<1x8xf32>
    %13 = vector.broadcast %12 : vector<1x8xf32> to vector<8x8xf32>
    %14 = arith.addf %11, %13 : vector<8x8xf32>
    %c0_11 = arith.constant 0 : index
    %15 = memref.load %arg1[%c0_11] : memref<1xf32, #tpu.memory_space<smem>>
    %16 = vector.broadcast %15 : f32 to vector<8x8xf32>
    %17 = arith.mulf %14, %16 : vector<8x8xf32>
    %cst_12 = arith.constant dense<0xFF800000> : vector<8xf32>
    %18 = vector.multi_reduction <maximumf>, %17, %cst_12 [1] : vector<8x8xf32> to vector<8xf32>
    %19 = vector.shape_cast %18 : vector<8xf32> to vector<8x1xf32>
    %20 = vector.broadcast %19 : vector<8x1xf32> to vector<8x8xf32>
    %21 = arith.subf %17, %20 : vector<8x8xf32>
    %22 = math.exp %21 : vector<8x8xf32>
    %cst_13 = arith.constant dense<0.000000e+00> : vector<8xf32>
    %23 = vector.multi_reduction <add>, %22, %cst_13 [1] : vector<8x8xf32> to vector<8xf32>
    %24 = vector.shape_cast %23 : vector<8xf32> to vector<8x1xf32>
    %25 = vector.broadcast %24 : vector<8x1xf32> to vector<8x8xf32>
    %26 = arith.divf %22, %25 : vector<8x8xf32>
    %c0_14 = arith.constant 0 : index
    %c0_15 = arith.constant 0 : index
    %27 = vector.load %arg7[%c0_14, %c0_15] : memref<8x8xf32, #tpu.memory_space<vmem>>, vector<8x8xf32>
    tpu.vector_store %arg7[%c0_14, %c0_15], %26 {strides = array<i32>} : memref<8x8xf32, #tpu.memory_space<vmem>>, vector<8x8xf32>,
    return
  }
  func.func @transform_0(%arg0: i32, %arg1: memref<1xf32, #tpu.memory_space<smem>>) -> (i32, i32) {
    %c0_i32 = arith.constant 0 : i32
    %c0_i32_0 = arith.constant 0 : i32
    return %arg0, %c0_i32 : i32, i32
  }
  func.func @transform_1(%arg0: i32, %arg1: memref<1xf32, #tpu.memory_space<smem>>) -> (i32, i32) {
    %c0_i32 = arith.constant 0 : i32
    %c0_i32_0 = arith.constant 0 : i32
    %c0_i32_1 = arith.constant 0 : i32
    return %c0_i32, %c0_i32_0 : i32, i32
  }
  func.func @transform_2(%arg0: i32, %arg1: memref<1xf32, #tpu.memory_space<smem>>) -> (i32, i32) {
    %c0_i32 = arith.constant 0 : i32
    %c0_i32_0 = arith.constant 0 : i32
    %c0_i32_1 = arith.constant 0 : i32
    return %c0_i32, %c0_i32_0 : i32, i32
  }
  func.func @transform_3(%arg0: i32, %arg1: memref<1xf32, #tpu.memory_space<smem>>) -> (i32, i32) {
    %c0_i32 = arith.constant 0 : i32
    %c0_i32_0 = arith.constant 0 : i32
    %c0_i32_1 = arith.constant 0 : i32
    return %c0_i32, %c0_i32_0 : i32, i32
  }
  func.func @transform_4(%arg0: i32, %arg1: memref<1xf32, #tpu.memory_space<smem>>) -> (i32, i32) {
    %c0_i32 = arith.constant 0 : i32
    %c0_i32_0 = arith.constant 0 : i32
    %c0_i32_1 = arith.constant 0 : i32
    return %c0_i32, %c0_i32_0 : i32, i32
  }
  func.func @transform_5(%arg0: i32, %arg1: memref<1xf32, #tpu.memory_space<smem>>) -> (i32, i32) {
    %c0_i32 = arith.constant 0 : i32
    %c0_i32_0 = arith.constant 0 : i32
    return %arg0, %c0_i32 : i32, i32
  }
}

</mosaic_0001>

<llo_original>
// kernel: tpu_custom_call.1
$region0: #{tpu_custom_call.1}
  #allocation0 [shape = 'u32[]', space=smem, size = 0x4, offset = 0x4, fixed_abs, tag = 'smem constant byte address 0x4 - core index']
  #allocation1 [shape = 'u32[144,128]{1,0:T(1,128)}', space=vmem, size = 0x12000, scoped, tag = 'internal scratch']
  #allocation2 [shape = 's32[1]{0}', space=sflag, size = 0x4, scoped, tag = 'scoped memory for tpu_custom_call.1']
  #allocation3 [shape = 'f32[1]{0:T(128)S(6)}', space=smem, size = 0x200, scoped, tag = 'prefetched SMEM operand 0']
  %s0 = inlined_call_operand.<no memory space> [shape: f32[1], index: 0, kind: input, shape index: {}]
  %s1 = inlined_call_operand.vmem [shape: f32[8,32], index: 1, kind: input, shape index: {}]
  %s2 = inlined_call_operand.vmem [shape: bf16[128,32], index: 2, kind: input, shape index: {}]
  %s3 = inlined_call_operand.vmem [shape: f32[1,128], index: 3, kind: input, shape index: {}]
  %s4 = inlined_call_operand.vmem [shape: bf16[8,128], index: 4, kind: input, shape index: {}]
  %s5 = inlined_call_operand.vmem [shape: f32[1,8], index: 5, kind: input, shape index: {}]
  %s6 = inlined_call_operand.hbm [shape: f32[8,8], index: 6, kind: output, shape index: {}]
  %s7 = sld [smem:[#allocation0]]
  $region30: #{tpu_custom_call.1} parent=0
    _
  %s9 = ssub.s32 1, %s7
  %s10 = scalar_select 0, %s9, %s7
  %11 = sst [smem:[#allocation3]] %s0
  $region1: #{tpu_custom_call.1} parent=0
    #allocation4 [shape = 'u8[4096]{0}', space=vmem, size = 0x1000, scoped, tag = 'output window, operand 0, single buffered']
    #allocation5 [shape = 's32[1]{0}', space=sflag, size = 0x4, scoped, tag = 'scoped memory for tpu_custom_call.1']
    %12 = vsyncpa [#allocation5], 0
    // Predicated region
    $region2: #{tpu_custom_call.1} parent=1 // pred_check
      _
    $region3: #{tpu_custom_call.1} parent=1 // pred_check_branch
      %14 = sbr.rel (0) target = $region5
    $region4: #{tpu_custom_call.1} parent=1 // pred_region
      _
    $region5: #{tpu_custom_call.1} parent=1 // pred_fallthru
      _
    // Predicated region
    $region6: #{tpu_custom_call.1} parent=1 // pred_check
      _
    $region7: #{tpu_custom_call.1} parent=1 // pred_check_branch
      %16 = sbr.rel (0) target = $region9
    $region8: #{tpu_custom_call.1} parent=1 // pred_region
      _
    $region9: #{tpu_custom_call.1} parent=1 // pred_fallthru
      _
    // Predicated region
    $region10: #{tpu_custom_call.1} parent=1 // pred_check
      _
    $region11: #{tpu_custom_call.1} parent=1 // pred_check_branch
      %18 = sbr.rel (0) target = $region13
    $region12: #{tpu_custom_call.1} parent=1 // pred_region
      _
    $region13: #{tpu_custom_call.1} parent=1 // pred_fallthru
      _
    // Predicated region
    $region14: #{tpu_custom_call.1} parent=1 // pred_check
      _
    $region15: #{tpu_custom_call.1} parent=1 // pred_check_branch
      %20 = sbr.rel (0) target = $region17
    $region16: #{tpu_custom_call.1} parent=1 // pred_region
      _
    $region17: #{tpu_custom_call.1} parent=1 // pred_fallthru
      _
    // Predicated region
    $region18: #{tpu_custom_call.1} parent=1 // pred_check
      _
    $region19: #{tpu_custom_call.1} parent=1 // pred_check_branch
      %22 = sbr.rel (0) target = $region21
    $region20: #{tpu_custom_call.1} parent=1 // pred_region
      _
    $region21: #{tpu_custom_call.1} parent=1 // pred_fallthru
      _
    %v24 = vld [vmem:[%s1] sm:$0xff]
    %v25 = vpack.c.bf16 %v24, %v24
    %v26 = vld [vmem:[%s2] sm:$0xf]
    %v27 = vld [vmem:[%s2 + $0x4] sm:$0xf]
    %v28 = vld [vmem:[%s2 + $0x8] sm:$0xf]
    %v29 = vld [vmem:[%s2 + $0xc] sm:$0xf]
    %v30 = vld [vmem:[%s2 + $0x10] sm:$0xf]
    %v31 = vld [vmem:[%s2 + $0x14] sm:$0xf]
    %v32 = vld [vmem:[%s2 + $0x18] sm:$0xf]
    %v33 = vld [vmem:[%s2 + $0x1c] sm:$0xf]
    %v34 = vld [vmem:[%s2 + $0x20] sm:$0xf]
    %v35 = vld [vmem:[%s2 + $0x24] sm:$0xf]
    %v36 = vld [vmem:[%s2 + $0x28] sm:$0xf]
    %v37 = vld [vmem:[%s2 + $0x2c] sm:$0xf]
    %v38 = vld [vmem:[%s2 + $0x30] sm:$0xf]
    %v39 = vld [vmem:[%s2 + $0x34] sm:$0xf]
    %v40 = vld [vmem:[%s2 + $0x38] sm:$0xf]
    %v41 = vld [vmem:[%s2 + $0x3c] sm:$0xf]
    %v42 = vld [vmem:[%s3] sm:$0x1]
    %v44 = vlaneseq
    %v45 = vshrl.u32 %v44, 7
    %v46 = vsub.s32 0, %v45
    %v47 = vrot.slane %v42, %v46
    %v65 = vunpack.c.l.b16 %v26
    %v66 = vunpack.c.l.b16 %v27
    %v67 = vunpack.c.l.b16 %v28
    %v68 = vunpack.c.l.b16 %v29
    %v69 = vunpack.c.l.b16 %v30
    %v70 = vunpack.c.l.b16 %v31
    %v71 = vunpack.c.l.b16 %v32
    %v72 = vunpack.c.l.b16 %v33
    %v73 = vunpack.c.l.b16 %v34
    %v74 = vunpack.c.l.b16 %v35
    %v75 = vunpack.c.l.b16 %v36
    %v76 = vunpack.c.l.b16 %v37
    %v77 = vunpack.c.l.b16 %v38
    %v78 = vunpack.c.l.b16 %v39
    %v79 = vunpack.c.l.b16 %v40
    %v80 = vunpack.c.l.b16 %v41
    %v81 = vpack.c.b16 %v66, %v65
    %v82 = vpack.c.b16 %v68, %v67
    %v83 = vpack.c.b16 %v70, %v69
    %v84 = vpack.c.b16 %v72, %v71
    %v85 = vpack.c.b16 %v74, %v73
    %v86 = vpack.c.b16 %v76, %v75
    %v87 = vpack.c.b16 %v78, %v77
    %v88 = vpack.c.b16 %v80, %v79
    %vm89 = vcmask 261120
    %v91 = vsel %vm89, %v25, 0
    %v94 = vsel %vm89, %v81, 0
    %v97 = vsel %vm89, %v82, 0
    %v100 = vsel %vm89, %v83, 0
    %v103 = vsel %vm89, %v84, 0
    %v106 = vsel %vm89, %v85, 0
    %v109 = vsel %vm89, %v86, 0
    %v112 = vsel %vm89, %v87, 0
    %v115 = vsel %vm89, %v88, 0
    %117 = vmatprep.subr.bf16.mxu0 0
    %118 = vmatpush1.bf16.xpose.msra.mxu0 %v115
    %119 = vmatprep.subr.bf16.mxu0 0
    %120 = vmatpush1.bf16.xpose.msra.mxu0 %v112
    %121 = vmatprep.subr.bf16.mxu0 0
    %122 = vmatpush1.bf16.xpose.msra.mxu0 %v109
    %123 = vmatprep.subr.bf16.mxu0 0
    %124 = vmatpush1.bf16.xpose.msra.mxu0 %v106
    %125 = vmatprep.subr.bf16.mxu0 0
    %126 = vmatpush1.bf16.xpose.msra.mxu0 %v103
    %127 = vmatprep.subr.bf16.mxu0 0
    %128 = vmatpush1.bf16.xpose.msra.mxu0 %v100
    %129 = vmatprep.subr.bf16.mxu0 0
    %130 = vmatpush1.bf16.xpose.msra.mxu0 %v97
    %131 = vmatprep.subr.bf16.mxu0 0
    %132 = vmatpush1.bf16.xpose.msra.mxu0 %v94
    %133 = vmatprep.subr.bf16.mxu0 0
    %134 = vmatpush2.bf16.xpose.msra.mxu0 0
    %135 = vmatprep.subr.bf16.mxu0 0
    %136 = vmatpush2.bf16.xpose.msra.mxu0 0
    %137 = vmatprep.subr.bf16.mxu0 0
    %138 = vmatpush2.bf16.xpose.msra.mxu0 0
    %139 = vmatprep.subr.bf16.mxu0 0
    %140 = vmatpush2.bf16.xpose.msra.mxu0 0
    %141 = vmatprep.subr.bf16.mxu0 0
    %142 = vmatpush2.bf16.xpose.msra.mxu0 0
    %143 = vmatprep.subr.bf16.mxu0 0
    %144 = vmatpush2.bf16.xpose.msra.mxu0 0
    %145 = vmatprep.subr.bf16.mxu0 0
    %146 = vmatpush2.bf16.xpose.msra.mxu0 0
    %147 = vmatprep.subr.bf16.mxu0 0
    %148 = vmatpush2.bf16.xpose.msra.mxu0 0
    %149 = vmatprep.mubr.bf16.mxu0 0
    %150 = vmatmul.mubr.bf16.gmra.mxu0 %v91
    %v151 = vpop.f32.mrf.mxu0
    %v152 = vadd.f32 %v47, %v151
    %v153 = vpop.f32.mrf.mxu0
    %v154 = vpop.f32.mrf.mxu0
    %v155 = vpop.f32.mrf.mxu0
    %156 = vdwg.mxu0
    %v157 = vmax.f32 %v152, 0.0
    %v158 = vpack.c.bf16 %v157, %v157
    %v159 = vld [vmem:[%s4] sm:$0xf]
    %v160 = vld [vmem:[%s5] sm:$0x1]
    %v162 = vlaneseq
    %v163 = vshrl.u32 %v162, 7
    %v164 = vsub.s32 0, %v163
    %v165 = vrot.slane %v160, %v164
    %167 = vmatprep.subr.bf16.mxu0 0
    %168 = vmatpush1.bf16.xpose.msra.mxu0 0
    %169 = vmatprep.subr.bf16.mxu0 0
    %170 = vmatpush1.bf16.xpose.msra.mxu0 0
    %171 = vmatprep.subr.bf16.mxu0 0
    %172 = vmatpush1.bf16.xpose.msra.mxu0 0
    %173 = vmatprep.subr.bf16.mxu0 0
    %174 = vmatpush1.bf16.xpose.msra.mxu0 0
    %175 = vmatprep.subr.bf16.mxu0 0
    %176 = vmatpush1.bf16.xpose.msra.mxu0 0
    %177 = vmatprep.subr.bf16.mxu0 0
    %178 = vmatpush1.bf16.xpose.msra.mxu0 0
    %179 = vmatprep.subr.bf16.mxu0 0
    %180 = vmatpush1.bf16.xpose.msra.mxu0 0
    %181 = vmatprep.subr.bf16.mxu0 0
    %182 = vmatpush1.bf16.xpose.msra.mxu0 %v159
    %183 = vmatprep.subr.bf16.mxu0 0
    %184 = vmatpush2.bf16.xpose.msra.mxu0 0
    %185 = vmatprep.subr.bf16.mxu0 0
    %186 = vmatpush2.bf16.xpose.msra.mxu0 0
    %187 = vmatprep.subr.bf16.mxu0 0
    %188 = vmatpush2.bf16.xpose.msra.mxu0 0
    %189 = vmatprep.subr.bf16.mxu0 0
    %190 = vmatpush2.bf16.xpose.msra.mxu0 0
    %191 = vmatprep.subr.bf16.mxu0 0
    %192 = vmatpush2.bf16.xpose.msra.mxu0 0
    %193 = vmatprep.subr.bf16.mxu0 0
    %194 = vmatpush2.bf16.xpose.msra.mxu0 0
    %195 = vmatprep.subr.bf16.mxu0 0
    %196 = vmatpush2.bf16.xpose.msra.mxu0 0
    %197 = vmatprep.subr.bf16.mxu0 0
    %198 = vmatpush2.bf16.xpose.msra.mxu0 0
    %199 = vmatprep.mubr.bf16.mxu0 0
    %200 = vmatmul.mubr.bf16.gmra.mxu0 %v158
    %v201 = vpop.f32.mrf.mxu0
    %v202 = vadd.f32 %v165, %v201
    %v203 = vpop.f32.mrf.mxu0
    %v204 = vpop.f32.mrf.mxu0
    %v205 = vpop.f32.mrf.mxu0
    %206 = vdwg.mxu0
    %s207 = sld [smem:[#allocation3]]
    %v208 = vstv %s207
    %v209 = vmul.f32 %v202, %v208
    %vm210 = vcmask 64512
    %v211 = vsel %vm210, %v209, -inf
    %212 = vmax.xlane.f32.xlu0 %v211
    %v213 = vpop.xlane.xlu0 %212
    %v214 = vsub.f32 %v209, %v213
    %v215 = vmul.f32 %v214, 1.442695
    %v216 = vpow.pop %v215
    %v217 = vsel %vm210, %v216, 0.0
    %218 = vadd.xlane.f32.xlu0 %v217
    %v219 = vpop.xlane.xlu0 %218
    %v220 = vrcp.pop %v219
    %v221 = vmul.f32 %v216, %v220
    %222 = vst.msk [vmem:[#allocation4] sm:$0xff] %vm210, %v221
    // Predicated region
    $region22: #{tpu_custom_call.1} parent=1 // pred_check
      _
    $region23: #{tpu_custom_call.1} parent=1 // pred_check_branch
      %224 = sbr.rel (0) target = $region25
    $region24: #{tpu_custom_call.1} parent=1 // pred_region
      %s226 = ssub.s32 128, 128
      %227 = vsyncadd [#allocation5], %s226
      %s229 = sshll.u32 [#allocation4], 4
      %s230 = int_to_ptr.vmem [resolvable:$true] %s229
      %232 = dma.vmem_to_hbm [thread:$0]  %s230, 128, %s6, [#allocation5]
    $region25: #{tpu_custom_call.1} parent=1 // pred_fallthru
      _
    // Predicated region
    $region26: #{tpu_custom_call.1} parent=1 // pred_check
      _
    $region27: #{tpu_custom_call.1} parent=1 // pred_check_branch
      %234 = sbr.rel (0) target = $region29
    $region28: #{tpu_custom_call.1} parent=1 // pred_region
      %235 = dma.done [#allocation5], 128
    $region29: #{tpu_custom_call.1} parent=1 // pred_fallthru
      _
    %236 = vsyncpa [#allocation5], 1

</llo_original>
